<compile_context>
chip_gen: v7x
topology: tpu7x:2x2x1
jax: 0.10.0
libtpu: 0.0.40
codegen_flags: <defaults>
</compile_context>

<pallas_src>
import math
import functools

import jax
import jax.numpy as jnp
from jax.experimental import pallas as pl
from jax.experimental.pallas import tpu as pltpu


def _rel_pos_table_kernel(inv_freq_ref, col_const_ref, o_ref, *,
                          rows_per_fused, max_len):
    """Writes one (Rt, W) tile of the fused-row relative positional table.

    Fused layout: W = rows_per_fused * dim_model.  Element (fr, c) of the fused
    table corresponds to original table row  r = fr * rows_per_fused + c // D
    and feature index                         f = c % D.
    Per-column constants live in VMEM (precomputed in the wrapper):
        inv_freq[c]  = 10000 ** (-2 * ((c % D) // 2) / D)
        col_const[c] = -(c // D) * inv_freq[c] + (pi/2 if (c % D) odd else 0)
    so  angle = row_pos * inv_freq + col_const  and  value = sin(angle).
    """
    Rt = o_ref.shape[0]
    r0 = pl.program_id(0) * Rt
    frow = jax.lax.broadcasted_iota(jnp.int32, (Rt, 1), 0)
    row_idx = (r0 + frow) * rows_per_fused                              # (Rt, 1)
    row_pos = jnp.float32(max_len - 1) - row_idx.astype(jnp.float32)    # (Rt, 1)
    angle = row_pos * inv_freq_ref[...] + col_const_ref[...]            # (Rt, W)
    o_ref[...] = jnp.sin(angle).astype(o_ref.dtype)


def _lcm(a, b):
    return a * b // math.gcd(a, b)


@functools.lru_cache(maxsize=None)
def _build_rel_pos_table(max_len, dim_model, dtype_name="float32",
                         max_block_bytes=2 << 20):
    """Builds the full (2*max_len-1, dim_model) table ONCE (cached buffer)."""
    dtype = jnp.dtype(dtype_name)
    D = dim_model
    L = 2 * max_len - 1

    # Lane-dense fused layout: fuse k consecutive rows so the last dim is a
    # multiple of 128 (k == 1 when D is already a multiple of 128).
    k = _lcm(D, 128) // D
    W = k * D
    R = pl.cdiv(L, k)                      # fused rows needed

    itemsize = dtype.itemsize
    sub = max(8, 32 // itemsize)           # sublane multiple: 8 for f32, 16 for bf16
    bytes_per_row = W * itemsize

    if R < sub:
        # Single full-extent block (no sublane-divisibility requirement).
        Rt, grid_r = R, 1
    else:
        cap = max(sub, (max_block_bytes // bytes_per_row) // sub * sub)
        # >= 2 grid steps so the "parallel" row axis shards across both v7x TCs.
        grid_r = max(2, pl.cdiv(R, cap))
        # Balanced, sublane-aligned tiles -> minimal padded-row overshoot.
        Rt = ((pl.cdiv(R, grid_r) + sub - 1) // sub) * sub
        grid_r = pl.cdiv(R, Rt)
    R_pad = grid_r * Rt                    # padded rows are computed then sliced off

    # ---- per-column constant strips, hoisted out of the kernel ----
    col = jnp.arange(W, dtype=jnp.int32)
    feat = col % D
    half = (feat // 2).astype(jnp.float32)
    inv_freq = jnp.exp(half * jnp.float32(-2.0 * math.log(10000.0) / D))
    # odd features use cos(x) = sin(x + pi/2): single transcendental per element
    phase = (feat % 2).astype(jnp.float32) * jnp.float32(math.pi / 2.0)
    col_const = -(col // D).astype(jnp.float32) * inv_freq + phase
    inv_freq = inv_freq.reshape(1, W)
    col_const = col_const.reshape(1, W)

    kernel = functools.partial(_rel_pos_table_kernel,
                               rows_per_fused=k, max_len=max_len)

    # Double-buffered output tile + two small (1, W) input strips + headroom.
    vmem_needed = 2 * Rt * W * itemsize + 4 * W * 4 + (1 << 20)
    vmem_limit = int(min(48 << 20, max(vmem_needed, 1 << 20)))

    table = pl.pallas_call(
        kernel,
        out_shape=jax.ShapeDtypeStruct((R_pad, W), dtype),
        grid_spec=pl.GridSpec(
            grid=(grid_r,),
            in_specs=[pl.BlockSpec((1, W), lambda r: (0, 0)),
                      pl.BlockSpec((1, W), lambda r: (0, 0))],
            out_specs=pl.BlockSpec((Rt, W), lambda r: (r, 0)),
        ),
        compiler_params=pltpu.CompilerParams(
            dimension_semantics=("parallel",),
            vmem_limit_bytes=vmem_limit),
    )(inv_freq, col_const)

    # Row-major reinterpretation back to (L, D); no transpose.
    return table.reshape(R_pad * k, D)[:L]


def relative_sinusoidal_pos_encoding(batch_size=1, seq_len=None, hidden_len=0,
                                     *, max_len, dim_model, causal=False,
                                     dtype=jnp.float32,
                                     max_block_bytes=2 << 20):
    """Pallas implementation of RelativeSinusoidalPositionalEncoding.forward."""
    total = 2 * max_len - 1
    if causal:
        if seq_len is not None:
            start, stop = max_len - seq_len - hidden_len, max_len
        else:
            start, stop = 0, max_len
    elif seq_len is not None:
        start, stop = max_len - seq_len - hidden_len, max_len - 1 + seq_len
    else:
        start, stop = 0, total
    if start < 0 or stop > total or stop <= start:
        raise ValueError(
            f"requested window [{start}, {stop}) lies outside the positional "
            f"table of {total} rows (seq_len + hidden_len must be <= max_len)")

    # Cached full table (built by the Pallas kernel once per config).
    table = _build_rel_pos_table(max_len, dim_model, jnp.dtype(dtype).name,
                                 max_block_bytes)
    window = jax.lax.slice_in_dim(table, start, stop, axis=0)   # (L, D)
    L = stop - start
    # Batch repeat is a lazy broadcast; under jit it fuses into the consumer
    # instead of materializing batch_size x L x D bytes in HBM.
    return jnp.broadcast_to(window[None], (batch_size, L, dim_model))


def _reference(batch_size, seq_len, hidden_len, *, max_len, dim_model, causal=False):
    """Pure-JAX port of the PyTorch module, for verification."""
    pos_left = jnp.arange(max_len - 1, 0, -1, dtype=jnp.float32)
    pos_right = jnp.arange(0, -max_len, -1, dtype=jnp.float32)
    pos = jnp.concatenate([pos_left, pos_right])[:, None]
    i = jnp.arange(0, dim_model // 2, dtype=jnp.float32)[None, :]
    angles = pos / 10000 ** (2 * i / dim_model)
    pe = jnp.zeros((2 * max_len - 1, dim_model), jnp.float32)
    pe = pe.at[:, 0::2].set(jnp.sin(angles))
    pe = pe.at[:, 1::2].set(jnp.cos(angles))
    pe = pe[None]
    if causal:
        if seq_len is not None:
            R = pe[:, max_len - seq_len - hidden_len:max_len]
        else:
            R = pe[:, :max_len]
    elif seq_len is not None:
        R = pe[:, max_len - seq_len - hidden_len:max_len - 1 + seq_len]
    else:
        R = pe
    return jnp.tile(R, (batch_size, 1, 1))


if __name__ == "__main__":
    # The module's forward takes no tensor inputs; key kept for convention.
    _ = jax.random.PRNGKey(0)

    # Small config: batch=2, seq=8, D=32 (non-causal).
    max_len, dim_model = 16, 32
    batch_size, seq_len, hidden_len = 2, 8, 0

    out = relative_sinusoidal_pos_encoding(
        batch_size=batch_size, seq_len=seq_len, hidden_len=hidden_len,
        max_len=max_len, dim_model=dim_model, causal=False)
    out = jax.block_until_ready(out)
    ref = _reference(batch_size, seq_len, hidden_len,
                     max_len=max_len, dim_model=dim_model, causal=False)
    assert out.shape == (batch_size, 2 * seq_len - 1 + hidden_len, dim_model), out.shape
    assert jnp.allclose(out, ref, atol=1e-5, rtol=1e-5), "mismatch vs reference (non-causal)"

    # Causal variant (reuses the cached table; kernel does not rerun).
    out_c = relative_sinusoidal_pos_encoding(
        batch_size=batch_size, seq_len=seq_len, hidden_len=hidden_len,
        max_len=max_len, dim_model=dim_model, causal=True)
    out_c = jax.block_until_ready(out_c)
    ref_c = _reference(batch_size, seq_len, hidden_len,
                       max_len=max_len, dim_model=dim_model, causal=True)
    assert out_c.shape == ref_c.shape
    assert jnp.allclose(out_c, ref_c, atol=1e-5, rtol=1e-5), "mismatch vs reference (causal)"

    # Larger full-table config with a small block cap to exercise the multi-step
    # row tiling and tile balancing.  Slightly looser tolerance: angles reach
    # ~max_len and the f32 exp/phase paths differ from pow/cos by a few ulps.
    out_big = relative_sinusoidal_pos_encoding(
        batch_size=1, seq_len=None, hidden_len=0,
        max_len=300, dim_model=64, causal=False, max_block_bytes=64 * 1024)
    out_big = jax.block_until_ready(out_big)
    ref_big = _reference(1, None, 0, max_len=300, dim_model=64, causal=False)
    assert out_big.shape == ref_big.shape
    assert jnp.allclose(out_big, ref_big, atol=2e-4, rtol=2e-4), "mismatch vs reference (tiled)"

    print("KERNEL_OK")
</pallas_src>

<mosaic_0001>
module attributes {stable_mosaic.version = 11 : i64} {
  func.func @_rel_pos_table_kernel(%arg0: i32, %arg1: memref<1x128xf32, #tpu.memory_space<vmem>>, %arg2: memref<1x128xf32, #tpu.memory_space<vmem>>, %arg3: memref<8x128xf32, #tpu.memory_space<vmem>>) attributes {dimension_semantics = [#tpu.dimension_semantics<parallel>], iteration_bounds = array<i64: 1>, scalar_prefetch = 0 : i64, scratch_operands = 0 : i64, tpu.core_type = #tpu.core_type<tc>, window_params = [{pipeline_mode = #tpu.pipeline_mode<synchronous>, transform_indices = @transform_0, window_bounds = array<i64: 1, 128>}, {pipeline_mode = #tpu.pipeline_mode<synchronous>, transform_indices = @transform_1, window_bounds = array<i64: 1, 128>}, {transform_indices = @transform_2, window_bounds = array<i64: 8, 128>}]} {
    %c8_i32 = arith.constant 8 : i32
    %0 = arith.muli %arg0, %c8_i32 : i32
    %1 = tpu.iota {dimensions = array<i32: 0>} : vector<8x1xi32>
    %2 = vector.broadcast %0 : i32 to vector<8x1xi32>
    %3 = arith.addi %2, %1 : vector<8x1xi32>
    %c4_i32 = arith.constant 4 : i32
    %4 = vector.broadcast %c4_i32 : i32 to vector<8x1xi32>
    %5 = arith.muli %3, %4 : vector<8x1xi32>
    %6 = arith.sitofp %5 : vector<8x1xi32> to vector<8x1xf32>
    %cst = arith.constant 1.500000e+01 : f32
    %7 = vector.broadcast %cst : f32 to vector<8x1xf32>
    %8 = arith.subf %7, %6 : vector<8x1xf32>
    %c0 = arith.constant 0 : index
    %c0_0 = arith.constant 0 : index
    %9 = vector.load %arg1[%c0, %c0_0] : memref<1x128xf32, #tpu.memory_space<vmem>>, vector<1x128xf32>
    %10 = vector.broadcast %8 : vector<8x1xf32> to vector<8x128xf32>
    %11 = vector.broadcast %9 : vector<1x128xf32> to vector<8x128xf32>
    %12 = arith.mulf %10, %11 : vector<8x128xf32>
    %c0_1 = arith.constant 0 : index
    %c0_2 = arith.constant 0 : index
    %13 = vector.load %arg2[%c0_1, %c0_2] : memref<1x128xf32, #tpu.memory_space<vmem>>, vector<1x128xf32>
    %14 = vector.broadcast %13 : vector<1x128xf32> to vector<8x128xf32>
    %15 = arith.addf %12, %14 : vector<8x128xf32>
    %16 = math.sin %15 : vector<8x128xf32>
    %c0_3 = arith.constant 0 : index
    %c0_4 = arith.constant 0 : index
    %17 = vector.load %arg3[%c0_3, %c0_4] : memref<8x128xf32, #tpu.memory_space<vmem>>, vector<8x128xf32>
    tpu.vector_store %arg3[%c0_3, %c0_4], %16 {strides = array<i32>} : memref<8x128xf32, #tpu.memory_space<vmem>>, vector<8x128xf32>,
    return
  }
  func.func @transform_0(%arg0: i32) -> (i32, i32) {
    %c0_i32 = arith.constant 0 : i32
    %c0_i32_0 = arith.constant 0 : i32
    %c0_i32_1 = arith.constant 0 : i32
    return %c0_i32, %c0_i32_0 : i32, i32
  }
  func.func @transform_1(%arg0: i32) -> (i32, i32) {
    %c0_i32 = arith.constant 0 : i32
    %c0_i32_0 = arith.constant 0 : i32
    %c0_i32_1 = arith.constant 0 : i32
    return %c0_i32, %c0_i32_0 : i32, i32
  }
  func.func @transform_2(%arg0: i32) -> (i32, i32) {
    %c0_i32 = arith.constant 0 : i32
    %c0_i32_0 = arith.constant 0 : i32
    return %arg0, %c0_i32 : i32, i32
  }
}

</mosaic_0001>

<llo_original>
// kernel: tpu_custom_call.1
$region0: #{tpu_custom_call.1}
  #allocation0 [shape = 'u32[]', space=smem, size = 0x4, offset = 0x4, fixed_abs, tag = 'smem constant byte address 0x4 - core index']
  #allocation1 [shape = 'u32[144,128]{1,0:T(1,128)}', space=vmem, size = 0x12000, scoped, tag = 'internal scratch']
  %s0 = inlined_call_operand.hbm [shape: f32[1,128], index: 0, kind: input, shape index: {}]
  %s1 = inlined_call_operand.vmem [shape: f32[1,128], index: 1, kind: input, shape index: {}]
  %s2 = inlined_call_operand.hbm [shape: f32[8,128], index: 2, kind: output, shape index: {}]
  %s3 = sld [smem:[#allocation0]]
  $region22: #{tpu_custom_call.1} parent=0
    _
  %s5 = ssub.s32 1, %s3
  %s6 = scalar_select 0, %s5, %s3
  $region1: #{tpu_custom_call.1} parent=0
    #allocation2 [shape = 'u8[512]{0}', space=vmem, size = 0x400, scoped, tag = 'input window, operand 0, single buffered']
    #allocation3 [shape = 's32[1]{0}', space=sflag, size = 0x4, scoped, tag = 'scoped memory for tpu_custom_call.1']
    #allocation4 [shape = 's32[1]{0}', space=sflag, size = 0x4, scoped, tag = 'scoped memory for tpu_custom_call.1']
    #allocation5 [shape = 'u8[4096]{0}', space=vmem, size = 0x1000, scoped, tag = 'output window, operand 0, single buffered']
    %7 = vsyncpa [#allocation3], 0
    %8 = vsyncpa [#allocation4], 0
    // Predicated region
    $region2: #{tpu_custom_call.1} parent=1 // pred_check
      _
    $region3: #{tpu_custom_call.1} parent=1 // pred_check_branch
      %10 = sbr.rel (0) target = $region5
    $region4: #{tpu_custom_call.1} parent=1 // pred_region
      %s12 = ssub.s32 16, 16
      %13 = vsyncadd [#allocation3], %s12
      %s15 = sshll.u32 [#allocation2], 4
      %s16 = int_to_ptr.vmem [resolvable:$true] %s15
      %18 = dma.hbm_to_vmem [thread:$0]  %s0, 16, %s16, [#allocation3]
    $region5: #{tpu_custom_call.1} parent=1 // pred_fallthru
      _
    // Predicated region
    $region6: #{tpu_custom_call.1} parent=1 // pred_check
      _
    $region7: #{tpu_custom_call.1} parent=1 // pred_check_branch
      %20 = sbr.rel (0) target = $region9
    $region8: #{tpu_custom_call.1} parent=1 // pred_region
      _
    $region9: #{tpu_custom_call.1} parent=1 // pred_fallthru
      _
    // Predicated region
    $region10: #{tpu_custom_call.1} parent=1 // pred_check
      _
    $region11: #{tpu_custom_call.1} parent=1 // pred_check_branch
      %22 = sbr.rel (0) target = $region13
    $region12: #{tpu_custom_call.1} parent=1 // pred_region
      %23 = dma.done [#allocation3], 16
    $region13: #{tpu_custom_call.1} parent=1 // pred_fallthru
      _
    %s24 = smul.u32 0, 8
    %v25 = vlaneseq
    %v26 = vshrl.u32 %v25, 7
    %v27 = vstv %s24
    %v28 = vadd.s32 %v27, %v26
    %v29 = vmul.u32 %v28, 4
    %v30 = vcvt.s32.f32 %v29
    %v31 = vsub.f32 15.0, %v30
    %v32 = vld [vmem:[#allocation2] sm:$0x1]
    %v34 = vlaneseq
    %v35 = vshrl.u32 %v34, 7
    %v36 = vsub.s32 0, %v35
    %v37 = vrot.slane %v32, %v36
    %v39 = vmul.f32 %v31, %v37
    %v40 = vld [vmem:[%s1] sm:$0x1]
    %v42 = vlaneseq
    %v43 = vshrl.u32 %v42, 7
    %v44 = vsub.s32 0, %v43
    %v45 = vrot.slane %v40, %v44
    %v47 = vadd.f32 %v39, %v45
    %v48 = vand.u32 2147483647, %v47
    %vm49 = vcmp.le.f32.partialorder %v48, 0.7853982
    %vm50 = vcmp.lt.s32.totalorder %v47, 0
    %v51 = vand.u32 %v47, 2139095040
    %v52 = vshrl.u32 %v51, 23
    %v53 = vsub.s32 %v52, 127
    %v54 = vand.u32 2147483647, %v47
    %v55 = vand.u32 %v54, 8388607
    %v56 = vor.u32 %v55, 8388608
    %v57 = vsub.s32 0, %v56
    %v58 = vadd.s32 %v53, 1
    %vm59 = vcmp.gt.s32.totalorder %v58, 0
    %v60 = vsel %vm59, %v58, 0
    %v61 = vshrl.u32 %v60, 5
    %v62 = vand.u32 %v60, 31
    %v63 = vsub.s32 32, %v62
    %v64 = vshrl.u32 683565275, %v63
    %v65 = vshll.u32 683565275, %v62
    %v66 = vshrl.u32 2475754826, %v63
    %v67 = vor.u32 %v65, %v66
    %v68 = vshll.u32 2475754826, %v62
    %v69 = vshrl.u32 2131351028, %v63
    %v70 = vor.u32 %v68, %v69
    %v71 = vshll.u32 2131351028, %v62
    %v72 = vshrl.u32 2102212464, %v63
    %v73 = vor.u32 %v71, %v72
    %v74 = vshll.u32 2102212464, %v62
    %v75 = vshrl.u32 920167782, %v63
    %v76 = vor.u32 %v74, %v75
    %v77 = vshll.u32 920167782, %v62
    %v78 = vshrl.u32 1326507024, %v63
    %v79 = vor.u32 %v77, %v78
    %vm80 = vcmp.lt.s32.totalorder %v61, 1
    %vm81 = vcmp.lt.s32.totalorder %v61, 2
    %vm82 = vcmp.lt.s32.totalorder %v61, 3
    %vm83 = vcmp.lt.s32.totalorder %v61, 4
    %v84 = vsel %vm80, %v64, %v67
    %v85 = vsel %vm83, %v73, 2102212464
    %v86 = vsel %vm82, %v70, %v85
    %v87 = vsel %vm81, %v84, %v86
    %v88 = vsel %vm80, %v67, %v70
    %v89 = vsel %vm83, %v76, 920167782
    %v90 = vsel %vm82, %v73, %v89
    %v91 = vsel %vm81, %v88, %v90
    %v92 = vsel %vm80, %v70, %v73
    %v93 = vsel %vm83, %v79, 1326507024
    %v94 = vsel %vm82, %v76, %v93
    %v95 = vsel %vm81, %v92, %v94
    %v96 = vshll.u32 %v56, 8
    %v97 = vmul.u32.u64.compose %v96, %v95
    %v98 = vextract.low.u32 %v97
    %v99 = vextract.high.u32 %v97
    %v100 = vmul.u32.u64.compose %v96, %v91
    %v101 = vextract.low.u32 %v100
    %v102 = vextract.high.u32 %v100
    %v103 = vmul.u32 %v96, %v87
    %v104 = vadd.s32 %v99, %v101
    %vm105 = vc.u32 %v99, %v101
    %v106 = vadd.s32 %v102, 1
    %v107 = vsel %vm105, %v106, %v102
    %v108 = vadd.s32 %v103, %v107
    %v109 = vadd.s32 %v108, 536870912
    %v110 = vshrl.u32 %v109, 30
    %v111 = vshll.u32 %v110, 30
    %v112 = vsub.s32 %v108, %v111
    %vm113 = vcmp.lt.s32.totalorder %v112, 0
    %v114 = vsub.s32 0, %v112
    %v115 = vsel %vm113, %v114, %v112
    %v116 = vclz %v115
    %v117 = vsub.s32 %v116, 2
    %vm118 = vcmp.gt.s32.totalorder 0, %v117
    %v119 = vsel %vm118, 0, %v117
    %v120 = vsub.s32 32, %v119
    %v121 = vshll.u32 %v112, %v119
    %v122 = vshrl.u32 %v104, %v120
    %v123 = vor.u32 %v121, %v122
    %v124 = vsub.s32 4294967266, %v119
    %v125 = vadd.s32 %v124, 127
    %v126 = vshll.u32 %v125, 23
    %v127 = vor.u32 4788187, %v126
    %v128 = vand.u32 2147483647, %v127
    %v130 = vcvt.s32.f32 %v123
    %v131 = vmul.f32 %v130, %v128
    %v132 = vxor.u32 %v131, 2147483648
    %v133 = vsel %vm50, %v132, %v131
    %v134 = vsub.s32 4, %v110
    %v135 = vsel %vm50, %v134, %v110
    %v136 = vsel %vm49, %v47, %v133
    %v137 = vsel %vm49, 0, %v135
    %v138 = vcosq.f32.pop %v136
    %v139 = vsinq.f32.pop %v136
    %vm140 = vweird.f32 %v47
    %v141 = vadd.s32 %v137, 3
    %v142 = vand.u32 %v141, 3
    %vm143 = vcmp.lt.s32.totalorder %v142, 2
    %vm144 = vcmp.eq.s32.totalorder %v142, 0
    %v145 = vxor.u32 %v139, 2147483648
    %v146 = vsel %vm144, %v138, %v145
    %vm147 = vcmp.eq.s32.totalorder %v142, 2
    %v148 = vxor.u32 %v138, 2147483648
    %v149 = vsel %vm147, %v148, %v139
    %v150 = vsel %vm143, %v146, %v149
    %v151 = vsel %vm140, nan, %v150
    %152 = vst [vmem:[#allocation5] sm:$0xff] %v151
    // Predicated region
    $region14: #{tpu_custom_call.1} parent=1 // pred_check
      _
    $region15: #{tpu_custom_call.1} parent=1 // pred_check_branch
      %154 = sbr.rel (0) target = $region17
    $region16: #{tpu_custom_call.1} parent=1 // pred_region
      %s156 = ssub.s32 128, 128
      %157 = vsyncadd [#allocation4], %s156
      %s159 = sshll.u32 [#allocation5], 4
      %s160 = int_to_ptr.vmem [resolvable:$true] %s159
      %162 = dma.vmem_to_hbm [thread:$0]  %s160, 128, %s2, [#allocation4]
    $region17: #{tpu_custom_call.1} parent=1 // pred_fallthru
      _
    // Predicated region
    $region18: #{tpu_custom_call.1} parent=1 // pred_check
      _
    $region19: #{tpu_custom_call.1} parent=1 // pred_check_branch
      %164 = sbr.rel (0) target = $region21
    $region20: #{tpu_custom_call.1} parent=1 // pred_region
      %165 = dma.done [#allocation4], 128
    $region21: #{tpu_custom_call.1} parent=1 // pred_fallthru
      _
    %166 = vsyncpa [#allocation3], 1
    %167 = vsyncpa [#allocation4], 1

</llo_original>
